<compile_context>
chip_gen: v6e
topology: v6e:2x2x1
jax: 0.10.0
libtpu: 0.0.40
codegen_flags: <defaults>
</compile_context>

<pallas_src>
import functools

import jax
import jax.numpy as jnp
import numpy as np
from jax.experimental import pallas as pl
from jax.experimental.pallas import tpu as pltpu


def _down_kernel(x_ref, scol_ref, w1_ref, b1_ref, w2_ref, b2_ref, o_ref, *,
                 H, W, Cin, Cout):
    """One batch element per grid step.

    x_ref   : (H, W*Cin)                 input slab, lanes = (w, cin)
    scol_ref: (2, W*Cin, Wp*Cin)         even/odd column-selection matrices
    w1_ref  : (3, Wp*Cin, Wo1*Cout)      lifted conv1 weights (dx + cin folded)
    b1_ref  : (1, Wo1*Cout)              conv1 bias, tiled over Wo1
    w2_ref  : (3, Wo1*Cout, Wo2*Cout)    lifted conv2 weights
    b2_ref  : (1, Wo2*Cout)              conv2 bias, tiled over Wo2
    o_ref   : (1, Ho2, Wo2*Cout)         output slab, lanes = (w, cout)
    """
    Hp, Wp = H // 2, W // 2
    Ho1, Wo1 = Hp - 2, Wp - 2
    Ho2, Wo2 = Ho1 - 2, Wo1 - 2
    f32 = jnp.float32

    x = x_ref[...]                                          # (H, W*Cin)

    # ---- 2x2 / stride-2 max pool (vectorized, no scratch) -----------------
    # Row pairs: pick even / odd rows with tiny 0/1 matrices on the MXU, max.
    ri = jax.lax.broadcasted_iota(jnp.int32, (Hp, H), 0)
    ci = jax.lax.broadcasted_iota(jnp.int32, (Hp, H), 1)
    s_row_even = (ci == 2 * ri).astype(f32)                 # rows 0,2,4,...
    s_row_odd = (ci == 2 * ri + 1).astype(f32)              # rows 1,3,5,...
    rmax = jnp.maximum(
        jnp.dot(s_row_even, x, preferred_element_type=f32),
        jnp.dot(s_row_odd, x, preferred_element_type=f32))  # (Hp, W*Cin)

    # Column pairs: even / odd (w, c)-lane selection matrices (built in the
    # wrapper), applied on the right; output lanes are pool-compacted.
    pooled = jnp.maximum(
        jnp.dot(rmax, scol_ref[0], preferred_element_type=f32),
        jnp.dot(rmax, scol_ref[1], preferred_element_type=f32))  # (Hp, Wp*Cin)

    # ---- conv1 (3x3, valid) + ReLU: 3 MXU dots ----------------------------
    # w1_ref[dy][wi*Cin + c, wo*Cout + o] = w1[dy, wi - wo, c, o] (banded lift),
    # so one dot per dy contracts both the width taps and the input channels.
    acc1 = jnp.zeros((Ho1, Wo1 * Cout), f32)
    for dy in range(3):
        acc1 = acc1 + jnp.dot(pooled[dy:dy + Ho1, :], w1_ref[dy],
                              preferred_element_type=f32)
    a1 = jnp.maximum(acc1 + b1_ref[...], 0.0)               # (Ho1, Wo1*Cout)

    # ---- conv2 (3x3, valid) + ReLU: 3 MXU dots ----------------------------
    acc2 = jnp.zeros((Ho2, Wo2 * Cout), f32)
    for dy in range(3):
        acc2 = acc2 + jnp.dot(a1[dy:dy + Ho2, :], w2_ref[dy],
                              preferred_element_type=f32)
    out = jnp.maximum(acc2 + b2_ref[...], 0.0)              # (Ho2, Wo2*Cout)

    # Single lane-dense store for the whole block.
    o_ref[0] = out.astype(o_ref.dtype)


def _pool_col_select(W, Cin):
    """(2, W*Cin, Wp*Cin) 0/1 matrices selecting even / odd image columns."""
    Wp = W // 2
    s = np.zeros((2, W * Cin, Wp * Cin), np.float32)
    for j in range(Wp):
        for c in range(Cin):
            s[0, (2 * j) * Cin + c, j * Cin + c] = 1.0
            s[1, (2 * j + 1) * Cin + c, j * Cin + c] = 1.0
    return jnp.asarray(s)


def _lift_conv_weight(w_hwio, w_in, w_out):
    """Lift HWIO 3x3 weights into per-dy banded matrices for the lane-flattened
    layout:

        big[dy, wi*Cin + c, wo*Cout + o] = w[dy, wi - wo, c, o]  if 0 <= wi-wo < 3

    so each conv becomes 3 dots (one per dy) with the dx taps and channel
    contraction folded into a single right-hand operand.
    """
    kh, kw, ci, co = w_hwio.shape
    sel = np.zeros((kw, w_in, w_out), np.float32)
    for dx in range(kw):
        for wo in range(w_out):
            sel[dx, wo + dx, wo] = 1.0
    big = jnp.einsum('xWw,yxco->yWcwo', jnp.asarray(sel), w_hwio)
    return big.reshape(kh, w_in * ci, w_out * co)


def down_forward(x_nchw, w1_hwio, b1, w2_hwio, b2):
    """Down.forward: maxpool(2,2) -> conv3x3 -> relu -> conv3x3 -> relu.

    x_nchw: (N, Cin, H, W) float32. Returns (N, Cout, H//2 - 4, W//2 - 4).
    """
    N, Cin, H, W = x_nchw.shape
    Cout = w1_hwio.shape[-1]
    assert H % 2 == 0 and W % 2 == 0, "MaxPool2d(2, 2) requires even H and W"
    Hp, Wp = H // 2, W // 2
    Ho1, Wo1 = Hp - 2, Wp - 2
    Ho2, Wo2 = Ho1 - 2, Wo1 - 2
    assert Ho2 > 0 and Wo2 > 0, "pooled image too small for two valid 3x3 convs"

    # NCHW -> NHWC -> (N*H, W*Cin): channels-last, lane-dense rows.
    x2d = jnp.transpose(x_nchw, (0, 2, 3, 1)).reshape(N * H, W * Cin)
    x2d = x2d.astype(jnp.float32)

    scol = _pool_col_select(W, Cin)                                  # (2, W*Cin, Wp*Cin)
    w1l = _lift_conv_weight(w1_hwio.astype(jnp.float32), Wp, Wo1)    # (3, Wp*Cin, Wo1*Cout)
    w2l = _lift_conv_weight(w2_hwio.astype(jnp.float32), Wo1, Wo2)   # (3, Wo1*Cout, Wo2*Cout)
    b1t = jnp.tile(b1.astype(jnp.float32).reshape(1, Cout), (1, Wo1))  # (1, Wo1*Cout)
    b2t = jnp.tile(b2.astype(jnp.float32).reshape(1, Cout), (1, Wo2))  # (1, Wo2*Cout)

    kernel = functools.partial(_down_kernel, H=H, W=W, Cin=Cin, Cout=Cout)

    out = pl.pallas_call(
        kernel,
        out_shape=jax.ShapeDtypeStruct((N, Ho2, Wo2 * Cout), jnp.float32),
        grid_spec=pltpu.PrefetchScalarGridSpec(
            num_scalar_prefetch=0,
            grid=(N,),
            in_specs=[
                pl.BlockSpec((H, W * Cin), lambda n: (n, 0)),
                pl.BlockSpec((2, W * Cin, Wp * Cin), lambda n: (0, 0, 0)),
                pl.BlockSpec((3, Wp * Cin, Wo1 * Cout), lambda n: (0, 0, 0)),
                pl.BlockSpec((1, Wo1 * Cout), lambda n: (0, 0)),
                pl.BlockSpec((3, Wo1 * Cout, Wo2 * Cout), lambda n: (0, 0, 0)),
                pl.BlockSpec((1, Wo2 * Cout), lambda n: (0, 0)),
            ],
            out_specs=pl.BlockSpec((1, Ho2, Wo2 * Cout), lambda n: (n, 0, 0)),
        ),
        compiler_params=pltpu.CompilerParams(
            dimension_semantics=("parallel",)),
    )(x2d, scol, w1l, b1t, w2l, b2t)

    # (N, Ho2, Wo2*Cout) -> (N, Ho2, Wo2, Cout) -> NCHW
    return jnp.transpose(out.reshape(N, Ho2, Wo2, Cout), (0, 3, 1, 2))


def _reference_down(x_nchw, w1_hwio, b1, w2_hwio, b2):
    """Pure-JAX reference with XLA ops (for a sanity check)."""
    xp = jax.lax.reduce_window(
        x_nchw, -jnp.inf, jax.lax.max,
        window_dimensions=(1, 1, 2, 2), window_strides=(1, 1, 2, 2),
        padding="VALID")

    def conv(x, w_hwio, b):
        w_oihw = jnp.transpose(w_hwio, (3, 2, 0, 1))
        y = jax.lax.conv_general_dilated(
            x, w_oihw, window_strides=(1, 1), padding="VALID",
            dimension_numbers=("NCHW", "OIHW", "NCHW"))
        return y + b[None, :, None, None]

    y = jax.nn.relu(conv(xp, w1_hwio, b1))
    y = jax.nn.relu(conv(y, w2_hwio, b2))
    return y


if __name__ == "__main__":
    # Down(in_channels=4, out_channels=8), input NCHW = (2, 4, 16, 16).
    N, Cin, H, W = 2, 4, 16, 16
    Cout = 8

    key = jax.random.PRNGKey(0)
    kx, kw1, kb1, kw2, kb2 = jax.random.split(key, 5)

    x = jax.random.normal(kx, (N, Cin, H, W), dtype=jnp.float32)
    # Deterministic synthetic parameters (shapes match nn.Conv2d(Cin, Cout, 3)).
    w1 = 0.1 * jax.random.normal(kw1, (3, 3, Cin, Cout), dtype=jnp.float32)
    b1 = 0.1 * jax.random.normal(kb1, (Cout,), dtype=jnp.float32)
    w2 = 0.1 * jax.random.normal(kw2, (3, 3, Cout, Cout), dtype=jnp.float32)
    b2 = 0.1 * jax.random.normal(kb2, (Cout,), dtype=jnp.float32)

    out = jax.block_until_ready(down_forward(x, w1, b1, w2, b2))
    assert out.shape == (N, Cout, H // 2 - 4, W // 2 - 4), out.shape

    ref = jax.block_until_ready(_reference_down(x, w1, b1, w2, b2))
    np.testing.assert_allclose(np.asarray(out), np.asarray(ref),
                               rtol=1e-2, atol=1e-2)

    print("KERNEL_OK")
</pallas_src>

<mosaic_0001>
module attributes {stable_mosaic.version = 11 : i64} {
  func.func @_down_kernel(%arg0: i32, %arg1: memref<16x64xf32, #tpu.memory_space<vmem>>, %arg2: memref<2x64x32xf32, #tpu.memory_space<vmem>>, %arg3: memref<3x32x48xf32, #tpu.memory_space<vmem>>, %arg4: memref<1x48xf32, #tpu.memory_space<vmem>>, %arg5: memref<3x48x32xf32, #tpu.memory_space<vmem>>, %arg6: memref<1x32xf32, #tpu.memory_space<vmem>>, %arg7: memref<1x4x32xf32, #tpu.memory_space<vmem>>) attributes {dimension_semantics = [#tpu.dimension_semantics<parallel>], iteration_bounds = array<i64: 2>, scalar_prefetch = 0 : i64, scratch_operands = 0 : i64, tpu.core_type = #tpu.core_type<tc>, window_params = [{transform_indices = @transform_0, window_bounds = array<i64: 16, 64>}, {pipeline_mode = #tpu.pipeline_mode<synchronous>, transform_indices = @transform_1, window_bounds = array<i64: 2, 64, 32>}, {pipeline_mode = #tpu.pipeline_mode<synchronous>, transform_indices = @transform_2, window_bounds = array<i64: 3, 32, 48>}, {pipeline_mode = #tpu.pipeline_mode<synchronous>, transform_indices = @transform_3, window_bounds = array<i64: 1, 48>}, {pipeline_mode = #tpu.pipeline_mode<synchronous>, transform_indices = @transform_4, window_bounds = array<i64: 3, 48, 32>}, {pipeline_mode = #tpu.pipeline_mode<synchronous>, transform_indices = @transform_5, window_bounds = array<i64: 1, 32>}, {transform_indices = @transform_6, window_bounds = array<i64: 1, 4, 32>}]} {
    %c0 = arith.constant 0 : index
    %c0_0 = arith.constant 0 : index
    %0 = vector.load %arg1[%c0, %c0_0] : memref<16x64xf32, #tpu.memory_space<vmem>>, vector<16x64xf32>
    %1 = tpu.iota {dimensions = array<i32: 0>} : vector<8x16xi32>
    %2 = tpu.iota {dimensions = array<i32: 1>} : vector<8x16xi32>
    %c2_i32 = arith.constant 2 : i32
    %3 = vector.broadcast %c2_i32 : i32 to vector<8x16xi32>
    %4 = arith.muli %3, %1 : vector<8x16xi32>
    %5 = arith.cmpi eq, %2, %4 : vector<8x16xi32>
    %6 = arith.extui %5 : vector<8x16xi1> to vector<8x16xi32>
    %7 = arith.sitofp %6 : vector<8x16xi32> to vector<8x16xf32>
    %c2_i32_1 = arith.constant 2 : i32
    %8 = vector.broadcast %c2_i32_1 : i32 to vector<8x16xi32>
    %9 = arith.muli %8, %1 : vector<8x16xi32>
    %c1_i32 = arith.constant 1 : i32
    %10 = vector.broadcast %c1_i32 : i32 to vector<8x16xi32>
    %11 = arith.addi %9, %10 : vector<8x16xi32>
    %12 = arith.cmpi eq, %2, %11 : vector<8x16xi32>
    %13 = arith.extui %12 : vector<8x16xi1> to vector<8x16xi32>
    %14 = arith.sitofp %13 : vector<8x16xi32> to vector<8x16xf32>
    %cst = arith.constant dense<0.000000e+00> : vector<8x64xf32>
    %15 = tpu.matmul %7, %0, %cst {dimension_numbers = #tpu.dot_dimension_numbers<[1], [0], [0], [1], [0, 0, 1, 1], [], []>} : vector<8x16xf32>, vector<16x64xf32>, vector<8x64xf32> -> vector<8x64xf32>
    %cst_2 = arith.constant dense<0.000000e+00> : vector<8x64xf32>
    %16 = tpu.matmul %14, %0, %cst_2 {dimension_numbers = #tpu.dot_dimension_numbers<[1], [0], [0], [1], [0, 0, 1, 1], [], []>} : vector<8x16xf32>, vector<16x64xf32>, vector<8x64xf32> -> vector<8x64xf32>
    %17 = arith.maximumf %15, %16 : vector<8x64xf32>
    %c0_3 = arith.constant 0 : index
    %c0_4 = arith.constant 0 : index
    %c0_5 = arith.constant 0 : index
    %18 = vector.load %arg2[%c0_3, %c0_4, %c0_5] : memref<2x64x32xf32, #tpu.memory_space<vmem>>, vector<1x64x32xf32>
    %19 = vector.shape_cast %18 : vector<1x64x32xf32> to vector<64x32xf32>
    %cst_6 = arith.constant dense<0.000000e+00> : vector<8x32xf32>
    %20 = tpu.matmul %17, %19, %cst_6 {dimension_numbers = #tpu.dot_dimension_numbers<[1], [0], [0], [1], [0, 0, 1, 1], [], []>} : vector<8x64xf32>, vector<64x32xf32>, vector<8x32xf32> -> vector<8x32xf32>
    %c1 = arith.constant 1 : index
    %c0_7 = arith.constant 0 : index
    %c0_8 = arith.constant 0 : index
    %21 = vector.load %arg2[%c1, %c0_7, %c0_8] : memref<2x64x32xf32, #tpu.memory_space<vmem>>, vector<1x64x32xf32>
    %22 = vector.shape_cast %21 : vector<1x64x32xf32> to vector<64x32xf32>
    %cst_9 = arith.constant dense<0.000000e+00> : vector<8x32xf32>
    %23 = tpu.matmul %17, %22, %cst_9 {dimension_numbers = #tpu.dot_dimension_numbers<[1], [0], [0], [1], [0, 0, 1, 1], [], []>} : vector<8x64xf32>, vector<64x32xf32>, vector<8x32xf32> -> vector<8x32xf32>
    %24 = arith.maximumf %20, %23 : vector<8x32xf32>
    %cst_10 = arith.constant 0.000000e+00 : f32
    %25 = vector.broadcast %cst_10 : f32 to vector<6x48xf32>
    %26 = vector.extract_strided_slice %24 {offsets = [0, 0], sizes = [6, 32], strides = [1, 1]} : vector<8x32xf32> to vector<6x32xf32>
    %c0_11 = arith.constant 0 : index
    %c0_12 = arith.constant 0 : index
    %c0_13 = arith.constant 0 : index
    %27 = vector.load %arg3[%c0_11, %c0_12, %c0_13] : memref<3x32x48xf32, #tpu.memory_space<vmem>>, vector<1x32x48xf32>
    %28 = vector.shape_cast %27 : vector<1x32x48xf32> to vector<32x48xf32>
    %cst_14 = arith.constant dense<0.000000e+00> : vector<6x48xf32>
    %29 = tpu.matmul %26, %28, %cst_14 {dimension_numbers = #tpu.dot_dimension_numbers<[1], [0], [0], [1], [0, 0, 1, 1], [], []>} : vector<6x32xf32>, vector<32x48xf32>, vector<6x48xf32> -> vector<6x48xf32>
    %30 = arith.addf %25, %29 : vector<6x48xf32>
    %31 = vector.extract_strided_slice %24 {offsets = [1, 0], sizes = [6, 32], strides = [1, 1]} : vector<8x32xf32> to vector<6x32xf32>
    %c1_15 = arith.constant 1 : index
    %c0_16 = arith.constant 0 : index
    %c0_17 = arith.constant 0 : index
    %32 = vector.load %arg3[%c1_15, %c0_16, %c0_17] : memref<3x32x48xf32, #tpu.memory_space<vmem>>, vector<1x32x48xf32>
    %33 = vector.shape_cast %32 : vector<1x32x48xf32> to vector<32x48xf32>
    %cst_18 = arith.constant dense<0.000000e+00> : vector<6x48xf32>
    %34 = tpu.matmul %31, %33, %cst_18 {dimension_numbers = #tpu.dot_dimension_numbers<[1], [0], [0], [1], [0, 0, 1, 1], [], []>} : vector<6x32xf32>, vector<32x48xf32>, vector<6x48xf32> -> vector<6x48xf32>
    %35 = arith.addf %30, %34 : vector<6x48xf32>
    %36 = vector.extract_strided_slice %24 {offsets = [2, 0], sizes = [6, 32], strides = [1, 1]} : vector<8x32xf32> to vector<6x32xf32>
    %c2 = arith.constant 2 : index
    %c0_19 = arith.constant 0 : index
    %c0_20 = arith.constant 0 : index
    %37 = vector.load %arg3[%c2, %c0_19, %c0_20] : memref<3x32x48xf32, #tpu.memory_space<vmem>>, vector<1x32x48xf32>
    %38 = vector.shape_cast %37 : vector<1x32x48xf32> to vector<32x48xf32>
    %cst_21 = arith.constant dense<0.000000e+00> : vector<6x48xf32>
    %39 = tpu.matmul %36, %38, %cst_21 {dimension_numbers = #tpu.dot_dimension_numbers<[1], [0], [0], [1], [0, 0, 1, 1], [], []>} : vector<6x32xf32>, vector<32x48xf32>, vector<6x48xf32> -> vector<6x48xf32>
    %40 = arith.addf %35, %39 : vector<6x48xf32>
    %c0_22 = arith.constant 0 : index
    %c0_23 = arith.constant 0 : index
    %41 = vector.load %arg4[%c0_22, %c0_23] : memref<1x48xf32, #tpu.memory_space<vmem>>, vector<1x48xf32>
    %42 = vector.broadcast %41 : vector<1x48xf32> to vector<6x48xf32>
    %43 = arith.addf %40, %42 : vector<6x48xf32>
    %cst_24 = arith.constant 0.000000e+00 : f32
    %44 = vector.broadcast %cst_24 : f32 to vector<6x48xf32>
    %45 = arith.maximumf %43, %44 : vector<6x48xf32>
    %cst_25 = arith.constant 0.000000e+00 : f32
    %46 = vector.broadcast %cst_25 : f32 to vector<4x32xf32>
    %47 = vector.extract_strided_slice %45 {offsets = [0, 0], sizes = [4, 48], strides = [1, 1]} : vector<6x48xf32> to vector<4x48xf32>
    %c0_26 = arith.constant 0 : index
    %c0_27 = arith.constant 0 : index
    %c0_28 = arith.constant 0 : index
    %48 = vector.load %arg5[%c0_26, %c0_27, %c0_28] : memref<3x48x32xf32, #tpu.memory_space<vmem>>, vector<1x48x32xf32>
    %49 = vector.shape_cast %48 : vector<1x48x32xf32> to vector<48x32xf32>
    %cst_29 = arith.constant dense<0.000000e+00> : vector<4x32xf32>
    %50 = tpu.matmul %47, %49, %cst_29 {dimension_numbers = #tpu.dot_dimension_numbers<[1], [0], [0], [1], [0, 0, 1, 1], [], []>} : vector<4x48xf32>, vector<48x32xf32>, vector<4x32xf32> -> vector<4x32xf32>
    %51 = arith.addf %46, %50 : vector<4x32xf32>
    %52 = vector.extract_strided_slice %45 {offsets = [1, 0], sizes = [4, 48], strides = [1, 1]} : vector<6x48xf32> to vector<4x48xf32>
    %c1_30 = arith.constant 1 : index
    %c0_31 = arith.constant 0 : index
    %c0_32 = arith.constant 0 : index
    %53 = vector.load %arg5[%c1_30, %c0_31, %c0_32] : memref<3x48x32xf32, #tpu.memory_space<vmem>>, vector<1x48x32xf32>
    %54 = vector.shape_cast %53 : vector<1x48x32xf32> to vector<48x32xf32>
    %cst_33 = arith.constant dense<0.000000e+00> : vector<4x32xf32>
    %55 = tpu.matmul %52, %54, %cst_33 {dimension_numbers = #tpu.dot_dimension_numbers<[1], [0], [0], [1], [0, 0, 1, 1], [], []>} : vector<4x48xf32>, vector<48x32xf32>, vector<4x32xf32> -> vector<4x32xf32>
    %56 = arith.addf %51, %55 : vector<4x32xf32>
    %57 = vector.extract_strided_slice %45 {offsets = [2, 0], sizes = [4, 48], strides = [1, 1]} : vector<6x48xf32> to vector<4x48xf32>
    %c2_34 = arith.constant 2 : index
    %c0_35 = arith.constant 0 : index
    %c0_36 = arith.constant 0 : index
    %58 = vector.load %arg5[%c2_34, %c0_35, %c0_36] : memref<3x48x32xf32, #tpu.memory_space<vmem>>, vector<1x48x32xf32>
    %59 = vector.shape_cast %58 : vector<1x48x32xf32> to vector<48x32xf32>
    %cst_37 = arith.constant dense<0.000000e+00> : vector<4x32xf32>
    %60 = tpu.matmul %57, %59, %cst_37 {dimension_numbers = #tpu.dot_dimension_numbers<[1], [0], [0], [1], [0, 0, 1, 1], [], []>} : vector<4x48xf32>, vector<48x32xf32>, vector<4x32xf32> -> vector<4x32xf32>
    %61 = arith.addf %56, %60 : vector<4x32xf32>
    %c0_38 = arith.constant 0 : index
    %c0_39 = arith.constant 0 : index
    %62 = vector.load %arg6[%c0_38, %c0_39] : memref<1x32xf32, #tpu.memory_space<vmem>>, vector<1x32xf32>
    %63 = vector.broadcast %62 : vector<1x32xf32> to vector<4x32xf32>
    %64 = arith.addf %61, %63 : vector<4x32xf32>
    %cst_40 = arith.constant 0.000000e+00 : f32
    %65 = vector.broadcast %cst_40 : f32 to vector<4x32xf32>
    %66 = arith.maximumf %64, %65 : vector<4x32xf32>
    %c0_41 = arith.constant 0 : index
    %c0_42 = arith.constant 0 : index
    %c0_43 = arith.constant 0 : index
    %67 = vector.load %arg7[%c0_41, %c0_42, %c0_43] : memref<1x4x32xf32, #tpu.memory_space<vmem>>, vector<1x4x32xf32>
    %68 = vector.shape_cast %67 : vector<1x4x32xf32> to vector<4x32xf32>
    %69 = vector.shape_cast %66 : vector<4x32xf32> to vector<1x4x32xf32>
    tpu.vector_store %arg7[%c0_41, %c0_42, %c0_43], %69 {strides = array<i32>} : memref<1x4x32xf32, #tpu.memory_space<vmem>>, vector<1x4x32xf32>,
    return
  }
  func.func @transform_0(%arg0: i32) -> (i32, i32) {
    %c0_i32 = arith.constant 0 : i32
    %c0_i32_0 = arith.constant 0 : i32
    return %arg0, %c0_i32 : i32, i32
  }
  func.func @transform_1(%arg0: i32) -> (i32, i32, i32) {
    %c0_i32 = arith.constant 0 : i32
    %c0_i32_0 = arith.constant 0 : i32
    %c0_i32_1 = arith.constant 0 : i32
    %c0_i32_2 = arith.constant 0 : i32
    return %c0_i32, %c0_i32_0, %c0_i32_1 : i32, i32, i32
  }
  func.func @transform_2(%arg0: i32) -> (i32, i32, i32) {
    %c0_i32 = arith.constant 0 : i32
    %c0_i32_0 = arith.constant 0 : i32
    %c0_i32_1 = arith.constant 0 : i32
    %c0_i32_2 = arith.constant 0 : i32
    return %c0_i32, %c0_i32_0, %c0_i32_1 : i32, i32, i32
  }
  func.func @transform_3(%arg0: i32) -> (i32, i32) {
    %c0_i32 = arith.constant 0 : i32
    %c0_i32_0 = arith.constant 0 : i32
    %c0_i32_1 = arith.constant 0 : i32
    return %c0_i32, %c0_i32_0 : i32, i32
  }
  func.func @transform_4(%arg0: i32) -> (i32, i32, i32) {
    %c0_i32 = arith.constant 0 : i32
    %c0_i32_0 = arith.constant 0 : i32
    %c0_i32_1 = arith.constant 0 : i32
    %c0_i32_2 = arith.constant 0 : i32
    return %c0_i32, %c0_i32_0, %c0_i32_1 : i32, i32, i32
  }
  func.func @transform_5(%arg0: i32) -> (i32, i32) {
    %c0_i32 = arith.constant 0 : i32
    %c0_i32_0 = arith.constant 0 : i32
    %c0_i32_1 = arith.constant 0 : i32
    return %c0_i32, %c0_i32_0 : i32, i32
  }
  func.func @transform_6(%arg0: i32) -> (i32, i32, i32) {
    %c0_i32 = arith.constant 0 : i32
    %c0_i32_0 = arith.constant 0 : i32
    %c0_i32_1 = arith.constant 0 : i32
    return %arg0, %c0_i32, %c0_i32_0 : i32, i32, i32
  }
}

</mosaic_0001>

<llo_original>
// kernel: tpu_custom_call.1
$region0: #{tpu_custom_call.1}
  #allocation0 [shape = 'u32[]', space=smem, size = 0x4, offset = 0x4, fixed_abs, tag = 'smem constant byte address 0x4 - core index']
  #allocation1 [shape = 'u32[144,128]{1,0:T(1,128)}', space=vmem, size = 0x12000, scoped, tag = 'internal scratch']
  %s0 = inlined_call_operand.vmem [shape: f32[32,64], index: 0, kind: input, shape index: {}]
  %s1 = inlined_call_operand.vmem [shape: f32[2,64,32], index: 1, kind: input, shape index: {}]
  %s2 = inlined_call_operand.vmem [shape: f32[3,32,48], index: 2, kind: input, shape index: {}]
  %s3 = inlined_call_operand.vmem [shape: f32[1,48], index: 3, kind: input, shape index: {}]
  %s4 = inlined_call_operand.vmem [shape: f32[3,48,32], index: 4, kind: input, shape index: {}]
  %s5 = inlined_call_operand.vmem [shape: f32[1,32], index: 5, kind: input, shape index: {}]
  %s6 = inlined_call_operand.hbm [shape: f32[2,4,32], index: 6, kind: output, shape index: {}]
  %s7 = sld [smem:[#allocation0]]
  $region57: #{tpu_custom_call.1} parent=0
    _
  %s9 = ssub.s32 1, %s7
  %s10 = scalar_select 0, %s9, %s7
  $region1: #{tpu_custom_call.1} parent=0
    #allocation2 [shape = 'u8[4096]{0}', space=vmem, size = 0x1000, scoped, tag = 'output window, operand 0']
    #allocation3 [shape = 's32[2]{0}', space=sflag, size = 0x8, scoped, tag = 'scoped memory for tpu_custom_call.1']
    %11 = vsyncpa [#allocation3], 0
    %s12 = scalar_lea.sflag [#allocation3], 1
    %13 = vsyncpa %s12, 0
    loop: start=0, step=1, limit=4
    $region2: #{tpu_custom_call.1} parent=1 // loop_pre_header
      _
    $region3: #{tpu_custom_call.1} parent=1 // loop_header
      %s15 = sphi 0, %s19
      %p16 = scmp.ge.s32.totalorder %s15, 4
      %s25 = sphi 0, %s27
      %s28 = sphi 0, %s25
      %s29 = sphi 0, %s28
      %s45 = sphi 0, %s29
      %s49 = sphi 0, %s49
      %s51 = sphi 0, %s49
      %s52 = sphi 0, %s51
      %s66 = sphi 0, %s52
      %s70 = sphi 0, %s70
      %s72 = sphi 0, %s70
      %s73 = sphi 0, %s72
      %s87 = sphi 0, %s73
      %s91 = sphi 0, %s91
      %s93 = sphi 0, %s91
      %s94 = sphi 0, %s93
      %s108 = sphi 0, %s94
      %s112 = sphi 0, %s112
      %s114 = sphi 0, %s112
      %s115 = sphi 0, %s114
      %s129 = sphi 0, %s115
      %s133 = sphi 0, %s133
      %s135 = sphi 0, %s133
      %s136 = sphi 0, %s135
      %s150 = sphi 0, %s136
      %s156 = sphi 0, %s158
      %s159 = sphi 0, %s156
      %s160 = sphi 0, %s159
      %s176 = sphi 0, %s160
    $region4: #{tpu_custom_call.1} parent=1 // loop_header_branch
      %18 = sbr.rel (%p16) target = $region8
    $region5: #{tpu_custom_call.1} parent=1 // loop_body
      %s20 = ssub.s32 %s15, 1
      %s21 = ssub.s32 %s15, 2
      %s22 = sadd.s32 %s15, 1
      %s23 = ssub.s32 %s15, %s22
      %p24 = scmp.eq.s32.totalorder %s23, 0
      %s26 = sadd.s32 %s25, 1
      %s27 = scalar_select %p24, %s25, %s26
      %p30 = pneg %p24
      %p31 = scmp.eq.s32.totalorder %s15, 1
      %p32 = por %p30, %p31
      %p33 = scmp.ne.s32.totalorder %s25, %s28
      %p34 = scmp.eq.s32.totalorder %s15, 0
      %p35 = por %p33, %p34
      %p36 = scmp.ne.s32.totalorder %s25, %s28
      %p37 = scmp.eq.s32.totalorder %s20, 1
      %p38 = por %p36, %p37
      %p39 = scmp.ne.s32.totalorder %s28, %s29
      %p40 = scmp.eq.s32.totalorder %s20, 0
      %p41 = por %p39, %p40
      %p42 = scmp.ne.s32.totalorder %s28, %s29
      %p43 = scmp.eq.s32.totalorder %s21, 1
      %p44 = por %p42, %p43
      %p46 = scmp.ne.s32.totalorder %s29, %s45
      %p47 = scmp.eq.s32.totalorder %s21, 0
      %p48 = por %p46, %p47
      %s50 = sadd.s32 %s49, 1
      %p53 = scmp.eq.s32.totalorder %s15, 1
      %p54 = scmp.ne.s32.totalorder %s49, %s51
      %p55 = scmp.eq.s32.totalorder %s15, 0
      %p56 = por %p54, %p55
      %p57 = scmp.ne.s32.totalorder %s49, %s51
      %p58 = scmp.eq.s32.totalorder %s20, 1
      %p59 = por %p57, %p58
      %p60 = scmp.ne.s32.totalorder %s51, %s52
      %p61 = scmp.eq.s32.totalorder %s20, 0
      %p62 = por %p60, %p61
      %p63 = scmp.ne.s32.totalorder %s51, %s52
      %p64 = scmp.eq.s32.totalorder %s21, 1
      %p65 = por %p63, %p64
      %p67 = scmp.ne.s32.totalorder %s52, %s66
      %p68 = scmp.eq.s32.totalorder %s21, 0
      %p69 = por %p67, %p68
      %s71 = sadd.s32 %s70, 1
      %p74 = scmp.eq.s32.totalorder %s15, 1
      %p75 = scmp.ne.s32.totalorder %s70, %s72
      %p76 = scmp.eq.s32.totalorder %s15, 0
      %p77 = por %p75, %p76
      %p78 = scmp.ne.s32.totalorder %s70, %s72
      %p79 = scmp.eq.s32.totalorder %s20, 1
      %p80 = por %p78, %p79
      %p81 = scmp.ne.s32.totalorder %s72, %s73
      %p82 = scmp.eq.s32.totalorder %s20, 0
      %p83 = por %p81, %p82
      %p84 = scmp.ne.s32.totalorder %s72, %s73
      %p85 = scmp.eq.s32.totalorder %s21, 1
      %p86 = por %p84, %p85
      %p88 = scmp.ne.s32.totalorder %s73, %s87
      %p89 = scmp.eq.s32.totalorder %s21, 0
      %p90 = por %p88, %p89
      %s92 = sadd.s32 %s91, 1
      %p95 = scmp.eq.s32.totalorder %s15, 1
      %p96 = scmp.ne.s32.totalorder %s91, %s93
      %p97 = scmp.eq.s32.totalorder %s15, 0
      %p98 = por %p96, %p97
      %p99 = scmp.ne.s32.totalorder %s91, %s93
      %p100 = scmp.eq.s32.totalorder %s20, 1
      %p101 = por %p99, %p100
      %p102 = scmp.ne.s32.totalorder %s93, %s94
      %p103 = scmp.eq.s32.totalorder %s20, 0
      %p104 = por %p102, %p103
      %p105 = scmp.ne.s32.totalorder %s93, %s94
      %p106 = scmp.eq.s32.totalorder %s21, 1
      %p107 = por %p105, %p106
      %p109 = scmp.ne.s32.totalorder %s94, %s108
      %p110 = scmp.eq.s32.totalorder %s21, 0
      %p111 = por %p109, %p110
      %s113 = sadd.s32 %s112, 1
      %p116 = scmp.eq.s32.totalorder %s15, 1
      %p117 = scmp.ne.s32.totalorder %s112, %s114
      %p118 = scmp.eq.s32.totalorder %s15, 0
      %p119 = por %p117, %p118
      %p120 = scmp.ne.s32.totalorder %s112, %s114
      %p121 = scmp.eq.s32.totalorder %s20, 1
      %p122 = por %p120, %p121
      %p123 = scmp.ne.s32.totalorder %s114, %s115
      %p124 = scmp.eq.s32.totalorder %s20, 0
      %p125 = por %p123, %p124
      %p126 = scmp.ne.s32.totalorder %s114, %s115
      %p127 = scmp.eq.s32.totalorder %s21, 1
      %p128 = por %p126, %p127
      %p130 = scmp.ne.s32.totalorder %s115, %s129
      %p131 = scmp.eq.s32.totalorder %s21, 0
      %p132 = por %p130, %p131
      %s134 = sadd.s32 %s133, 1
      %p137 = scmp.eq.s32.totalorder %s15, 1
      %p138 = scmp.ne.s32.totalorder %s133, %s135
      %p139 = scmp.eq.s32.totalorder %s15, 0
      %p140 = por %p138, %p139
      %p141 = scmp.ne.s32.totalorder %s133, %s135
      %p142 = scmp.eq.s32.totalorder %s20, 1
      %p143 = por %p141, %p142
      %p144 = scmp.ne.s32.totalorder %s135, %s136
      %p145 = scmp.eq.s32.totalorder %s20, 0
      %p146 = por %p144, %p145
      %p147 = scmp.ne.s32.totalorder %s135, %s136
      %p148 = scmp.eq.s32.totalorder %s21, 1
      %p149 = por %p147, %p148
      %p151 = scmp.ne.s32.totalorder %s136, %s150
      %p152 = scmp.eq.s32.totalorder %s21, 0
      %p153 = por %p151, %p152
      %s154 = ssub.s32 %s15, %s22
      %p155 = scmp.eq.s32.totalorder %s154, 0
      %s157 = sadd.s32 %s156, 1
      %s158 = scalar_select %p155, %s156, %s157
      %p161 = pneg %p155
      %p162 = scmp.eq.s32.totalorder %s15, 1
      %p163 = por %p161, %p162
      %p164 = scmp.ne.s32.totalorder %s156, %s159
      %p165 = scmp.eq.s32.totalorder %s15, 0
      %p166 = por %p164, %p165
      %p167 = scmp.ne.s32.totalorder %s156, %s159
      %p168 = scmp.eq.s32.totalorder %s20, 1
      %p169 = por %p167, %p168
      %p170 = scmp.ne.s32.totalorder %s159, %s160
      %p171 = scmp.eq.s32.totalorder %s20, 0
      %p172 = por %p170, %p171
      %p173 = scmp.ne.s32.totalorder %s159, %s160
      %p174 = scmp.eq.s32.totalorder %s21, 1
      %p175 = por %p173, %p174
      %p177 = scmp.ne.s32.totalorder %s160, %s176
      %p178 = scmp.eq.s32.totalorder %s21, 0
      %p179 = por %p177, %p178
      %p180 = scmp.le.s32.totalorder 1, %s15
      %p181 = scmp.lt.s32.totalorder %s15, 3
      %p182 = pnand %p180, %p181
      %p183 = pneg %p182
      // Predicated region
      $region9: #{tpu_custom_call.1} parent=5 // pred_check
        _
      $region10: #{tpu_custom_call.1} parent=5 // pred_check_branch
        %185 = sbr.rel (%p182) target = $region12
      $region11: #{tpu_custom_call.1} parent=5 // pred_region
        %s186 = ssub.s32 %s15, 1
        // Predicated region
        $region13: #{tpu_custom_call.1} parent=11 // pred_check
          %p187 = pneg %p62
        $region14: #{tpu_custom_call.1} parent=11 // pred_check_branch
          %189 = sbr.rel (%p187) target = $region16
        $region15: #{tpu_custom_call.1} parent=11 // pred_region
          _
        $region16: #{tpu_custom_call.1} parent=11 // pred_fallthru
          _
        // Predicated region
        $region17: #{tpu_custom_call.1} parent=11 // pred_check
          %p190 = pneg %p83
        $region18: #{tpu_custom_call.1} parent=11 // pred_check_branch
          %192 = sbr.rel (%p190) target = $region20
        $region19: #{tpu_custom_call.1} parent=11 // pred_region
          _
        $region20: #{tpu_custom_call.1} parent=11 // pred_fallthru
          _
        // Predicated region
        $region21: #{tpu_custom_call.1} parent=11 // pred_check
          %p193 = pneg %p104
        $region22: #{tpu_custom_call.1} parent=11 // pred_check_branch
          %195 = sbr.rel (%p193) target = $region24
        $region23: #{tpu_custom_call.1} parent=11 // pred_region
          _
        $region24: #{tpu_custom_call.1} parent=11 // pred_fallthru
          _
        // Predicated region
        $region25: #{tpu_custom_call.1} parent=11 // pred_check
          %p196 = pneg %p125
        $region26: #{tpu_custom_call.1} parent=11 // pred_check_branch
          %198 = sbr.rel (%p196) target = $region28
        $region27: #{tpu_custom_call.1} parent=11 // pred_region
          _
        $region28: #{tpu_custom_call.1} parent=11 // pred_fallthru
          _
        // Predicated region
        $region29: #{tpu_custom_call.1} parent=11 // pred_check
          %p199 = pneg %p146
        $region30: #{tpu_custom_call.1} parent=11 // pred_check_branch
          %201 = sbr.rel (%p199) target = $region32
        $region31: #{tpu_custom_call.1} parent=11 // pred_region
          _
        $region32: #{tpu_custom_call.1} parent=11 // pred_fallthru
          _
      $region12: #{tpu_custom_call.1} parent=5 // pred_fallthru
        _
      %p202 = scmp.lt.s32.totalorder %s15, 2
      // Predicated region
      $region33: #{tpu_custom_call.1} parent=5 // pred_check
        %p203 = pneg %p202
      $region34: #{tpu_custom_call.1} parent=5 // pred_check_branch
        %205 = sbr.rel (%p203) target = $region36
      $region35: #{tpu_custom_call.1} parent=5 // pred_region
        // Predicated region
        $region37: #{tpu_custom_call.1} parent=35 // pred_check
          %p206 = pneg %p35
        $region38: #{tpu_custom_call.1} parent=35 // pred_check_branch
          %208 = sbr.rel (%p206) target = $region40
        $region39: #{tpu_custom_call.1} parent=35 // pred_region
          %s209 = smul.u32 2, %s15
          %p210 = scmp.lt.s32.totalorder %s209, 3
          %s211 = scalar_select %p210, %s209, 3
          %s212 = smul.addr %s211, 8
          %s213 = scalar_lea.vmem %s0, %s212
          %s214 = smul.u32 2, %s15
        $region40: #{tpu_custom_call.1} parent=35 // pred_fallthru
          _
      $region36: #{tpu_custom_call.1} parent=5 // pred_fallthru
        _
      %p215 = scmp.le.s32.totalorder 1, %s15
      %p216 = scmp.lt.s32.totalorder %s15, 3
      %p217 = pnand %p215, %p216
      %p218 = pneg %p217
      // Predicated region
      $region41: #{tpu_custom_call.1} parent=5 // pred_check
        _
      $region42: #{tpu_custom_call.1} parent=5 // pred_check_branch
        %220 = sbr.rel (%p217) target = $region44
      $region43: #{tpu_custom_call.1} parent=5 // pred_region
        %s221 = ssub.s32 %s15, 1
        %s222 = smul.u32 2, %s20
        %p223 = scmp.lt.s32.totalorder %s222, 3
        %s224 = scalar_select %p223, %s222, 3
        %s225 = smul.addr %s224, 8
        %s226 = scalar_lea.vmem %s0, %s225
        %p227 = pneg %p41
        %p228 = pneg %p38
        %p229 = pneg %p62
        %p230 = pneg %p59
        %p231 = pneg %p83
        %p232 = pneg %p80
        %p233 = pneg %p104
        %p234 = pneg %p101
        %p235 = pneg %p125
        %p236 = pneg %p122
        %p237 = pneg %p146
        %p238 = pneg %p143
        %p239 = pneg %p172
        %p240 = pneg %p169
        %s241 = sand.u32 %s159, 1
        %s242 = scalar_lea.sflag [#allocation3], %s241
        %s243 = sand.u32 %s159, 1
        %s244 = smul.addr %s243, 4
        %s245 = scalar_lea.vmem [#allocation2], %s244
        %s246 = smul.u32 2, %s20
        %p247 = scmp.lt.s32.totalorder %s246, 3
        %s248 = scalar_select %p247, %s246, 3
        %s249 = smul.addr %s248, 8
        %s250 = scalar_lea.vmem %s0, %s249
        %s251 = smul.u32 2, %s20
        %v252 = vld [vmem:[%s250] sm:$0xff]
        %v253 = vld [vmem:[%s250 + $0x8] sm:$0xff]
        %v254 = vlaneseq
        %v255 = vshrl.u32 %v254, 7
        %v256 = vlaneseq
        %v257 = vand.u32 %v256, 127
        %v258 = vmul.u32 %v255, 2
        %vm259 = vcmp.eq.s32.totalorder %v257, %v258
        %v260 = vsel %vm259, 1, 0
        %v261 = vcvt.s32.f32 %v260
        %v262 = vadd.s32 %v258, 1
        %vm263 = vcmp.eq.s32.totalorder %v257, %v262
        %v264 = vsel %vm263, 1, 0
        %v265 = vcvt.s32.f32 %v264
        %vm266 = vcmask 130048
        %v268 = vsel %vm266, %v261, 0
        %270 = vmatprep.subr.mxu0 0.0
        %271 = vmatpush1.msra.mxu0 0.0
        %272 = vmatprep.subr.mxu0 0.0
        %273 = vmatpush1.msra.mxu0 0.0
        %274 = vmatprep.subr.mxu0 0.0
        %275 = vmatpush1.msra.mxu0 0.0
        %276 = vmatprep.subr.mxu0 0.0
        %277 = vmatpush1.msra.mxu0 0.0
        %278 = vmatprep.subr.mxu0 0.0
        %279 = vmatpush1.msra.mxu0 0.0
        %280 = vmatprep.subr.mxu0 0.0
        %281 = vmatpush1.msra.mxu0 0.0
        %282 = vmatprep.subr.mxu0 0.0
        %283 = vmatpush1.msra.mxu0 0.0
        %284 = vmatprep.subr.mxu0 0.0
        %285 = vmatpush1.msra.mxu0 0.0
        %286 = vmatprep.subr.mxu0 0.0
        %287 = vmatpush1.msra.mxu0 0.0
        %288 = vmatprep.subr.mxu0 0.0
        %289 = vmatpush1.msra.mxu0 0.0
        %290 = vmatprep.subr.mxu0 0.0
        %291 = vmatpush1.msra.mxu0 0.0
        %292 = vmatprep.subr.mxu0 0.0
        %293 = vmatpush1.msra.mxu0 0.0
        %294 = vmatprep.subr.mxu0 0.0
        %295 = vmatpush1.msra.mxu0 0.0
        %296 = vmatprep.subr.mxu0 0.0
        %297 = vmatpush1.msra.mxu0 0.0
        %298 = vmatprep.subr.mxu0 0.0
        %299 = vmatpush1.msra.mxu0 %v253
        %300 = vmatprep.subr.mxu0 0.0
        %301 = vmatpush1.msra.mxu0 %v252
        %302 = vmatprep.subr.mxu0 0.0
        %303 = vmatpush2.msra.mxu0 0.0
        %304 = vmatprep.subr.mxu0 0.0
        %305 = vmatpush2.msra.mxu0 0.0
        %306 = vmatprep.subr.mxu0 0.0
        %307 = vmatpush2.msra.mxu0 0.0
        %308 = vmatprep.subr.mxu0 0.0
        %309 = vmatpush2.msra.mxu0 0.0
        %310 = vmatprep.subr.mxu0 0.0
        %311 = vmatpush2.msra.mxu0 0.0
        %312 = vmatprep.subr.mxu0 0.0
        %313 = vmatpush2.msra.mxu0 0.0
        %314 = vmatprep.subr.mxu0 0.0
        %315 = vmatpush2.msra.mxu0 0.0
        %316 = vmatprep.subr.mxu0 0.0
        %317 = vmatpush2.msra.mxu0 0.0
        %318 = vmatprep.subr.mxu0 0.0
        %319 = vmatpush2.msra.mxu0 0.0
        %320 = vmatprep.subr.mxu0 0.0
        %321 = vmatpush2.msra.mxu0 0.0
        %322 = vmatprep.subr.mxu0 0.0
        %323 = vmatpush2.msra.mxu0 0.0
        %324 = vmatprep.subr.mxu0 0.0
        %325 = vmatpush2.msra.mxu0 0.0
        %326 = vmatprep.subr.mxu0 0.0
        %327 = vmatpush2.msra.mxu0 0.0
        %328 = vmatprep.subr.mxu0 0.0
        %329 = vmatpush2.msra.mxu0 0.0
        %330 = vmatprep.subr.mxu0 0.0
        %331 = vmatpush2.msra.mxu0 0.0
        %332 = vmatprep.subr.mxu0 0.0
        %333 = vmatpush2.msra.mxu0 0.0
        %334 = vmatprep.mubr.f32.mxu0 0.0
        %335 = vmatmul.mubr.f32.gmra.mxu0 %v268
        %v336 = vpop.f32.mrf.mxu0
        %v337 = vadd.f32 0.0, %v336
        %v338 = vpop.f32.mrf.mxu0
        %339 = vdwg.mxu0
        %v341 = vsel %vm266, %v265, 0
        %343 = vmatprep.subr.mxu0 0.0
        %344 = vmatpush1.msra.mxu0 0.0
        %345 = vmatprep.subr.mxu0 0.0
        %346 = vmatpush1.msra.mxu0 0.0
        %347 = vmatprep.subr.mxu0 0.0
        %348 = vmatpush1.msra.mxu0 0.0
        %349 = vmatprep.subr.mxu0 0.0
        %350 = vmatpush1.msra.mxu0 0.0
        %351 = vmatprep.subr.mxu0 0.0
        %352 = vmatpush1.msra.mxu0 0.0
        %353 = vmatprep.subr.mxu0 0.0
        %354 = vmatpush1.msra.mxu0 0.0
        %355 = vmatprep.subr.mxu0 0.0
        %356 = vmatpush1.msra.mxu0 0.0
        %357 = vmatprep.subr.mxu0 0.0
        %358 = vmatpush1.msra.mxu0 0.0
        %359 = vmatprep.subr.mxu0 0.0
        %360 = vmatpush1.msra.mxu0 0.0
        %361 = vmatprep.subr.mxu0 0.0
        %362 = vmatpush1.msra.mxu0 0.0
        %363 = vmatprep.subr.mxu0 0.0
        %364 = vmatpush1.msra.mxu0 0.0
        %365 = vmatprep.subr.mxu0 0.0
        %366 = vmatpush1.msra.mxu0 0.0
        %367 = vmatprep.subr.mxu0 0.0
        %368 = vmatpush1.msra.mxu0 0.0
        %369 = vmatprep.subr.mxu0 0.0
        %370 = vmatpush1.msra.mxu0 0.0
        %371 = vmatprep.subr.mxu0 0.0
        %372 = vmatpush1.msra.mxu0 %v253
        %373 = vmatprep.subr.mxu0 0.0
        %374 = vmatpush1.msra.mxu0 %v252
        %375 = vmatprep.subr.mxu0 0.0
        %376 = vmatpush2.msra.mxu0 0.0
        %377 = vmatprep.subr.mxu0 0.0
        %378 = vmatpush2.msra.mxu0 0.0
        %379 = vmatprep.subr.mxu0 0.0
        %380 = vmatpush2.msra.mxu0 0.0
        %381 = vmatprep.subr.mxu0 0.0
        %382 = vmatpush2.msra.mxu0 0.0
        %383 = vmatprep.subr.mxu0 0.0
        %384 = vmatpush2.msra.mxu0 0.0
        %385 = vmatprep.subr.mxu0 0.0
        %386 = vmatpush2.msra.mxu0 0.0
        %387 = vmatprep.subr.mxu0 0.0
        %388 = vmatpush2.msra.mxu0 0.0
        %389 = vmatprep.subr.mxu0 0.0
        %390 = vmatpush2.msra.mxu0 0.0
        %391 = vmatprep.subr.mxu0 0.0
        %392 = vmatpush2.msra.mxu0 0.0
        %393 = vmatprep.subr.mxu0 0.0
        %394 = vmatpush2.msra.mxu0 0.0
        %395 = vmatprep.subr.mxu0 0.0
        %396 = vmatpush2.msra.mxu0 0.0
        %397 = vmatprep.subr.mxu0 0.0
        %398 = vmatpush2.msra.mxu0 0.0
        %399 = vmatprep.subr.mxu0 0.0
        %400 = vmatpush2.msra.mxu0 0.0
        %401 = vmatprep.subr.mxu0 0.0
        %402 = vmatpush2.msra.mxu0 0.0
        %403 = vmatprep.subr.mxu0 0.0
        %404 = vmatpush2.msra.mxu0 0.0
        %405 = vmatprep.subr.mxu0 0.0
        %406 = vmatpush2.msra.mxu0 0.0
        %407 = vmatprep.mubr.f32.mxu0 0.0
        %408 = vmatmul.mubr.f32.gmra.mxu0 %v341
        %v409 = vpop.f32.mrf.mxu0
        %v410 = vadd.f32 0.0, %v409
        %v411 = vpop.f32.mrf.mxu0
        %412 = vdwg.mxu0
        %v413 = vmax.f32 %v337, %v410
        %v414 = vld [vmem:[%s1] sm:$0xff]
        %v415 = vld [vmem:[%s1 + $0x8] sm:$0xff]
        %v416 = vld [vmem:[%s1 + $0x10] sm:$0xff]
        %v417 = vld [vmem:[%s1 + $0x18] sm:$0xff]
        %v418 = vld [vmem:[%s1 + $0x20] sm:$0xff]
        %v419 = vld [vmem:[%s1 + $0x28] sm:$0xff]
        %v420 = vld [vmem:[%s1 + $0x30] sm:$0xff]
        %v421 = vld [vmem:[%s1 + $0x38] sm:$0xff]
        %vm422 = vcmask 523264
        %v424 = vsel %vm422, %v413, 0
        %426 = vmatprep.subr.mxu0 0.0
        %427 = vmatpush1.msra.mxu0 0.0
        %428 = vmatprep.subr.mxu0 0.0
        %429 = vmatpush1.msra.mxu0 0.0
        %430 = vmatprep.subr.mxu0 0.0
        %431 = vmatpush1.msra.mxu0 0.0
        %432 = vmatprep.subr.mxu0 0.0
        %433 = vmatpush1.msra.mxu0 0.0
        %434 = vmatprep.subr.mxu0 0.0
        %435 = vmatpush1.msra.mxu0 0.0
        %436 = vmatprep.subr.mxu0 0.0
        %437 = vmatpush1.msra.mxu0 0.0
        %438 = vmatprep.subr.mxu0 0.0
        %439 = vmatpush1.msra.mxu0 0.0
        %440 = vmatprep.subr.mxu0 0.0
        %441 = vmatpush1.msra.mxu0 0.0
        %442 = vmatprep.subr.mxu0 0.0
        %443 = vmatpush1.msra.mxu0 %v421
        %444 = vmatprep.subr.mxu0 0.0
        %445 = vmatpush1.msra.mxu0 %v420
        %446 = vmatprep.subr.mxu0 0.0
        %447 = vmatpush1.msra.mxu0 %v419
        %448 = vmatprep.subr.mxu0 0.0
        %449 = vmatpush1.msra.mxu0 %v418
        %450 = vmatprep.subr.mxu0 0.0
        %451 = vmatpush1.msra.mxu0 %v417
        %452 = vmatprep.subr.mxu0 0.0
        %453 = vmatpush1.msra.mxu0 %v416
        %454 = vmatprep.subr.mxu0 0.0
        %455 = vmatpush1.msra.mxu0 %v415
        %456 = vmatprep.subr.mxu0 0.0
        %457 = vmatpush1.msra.mxu0 %v414
        %458 = vmatprep.subr.mxu0 0.0
        %459 = vmatpush2.msra.mxu0 0.0
        %460 = vmatprep.subr.mxu0 0.0
        %461 = vmatpush2.msra.mxu0 0.0
        %462 = vmatprep.subr.mxu0 0.0
        %463 = vmatpush2.msra.mxu0 0.0
        %464 = vmatprep.subr.mxu0 0.0
        %465 = vmatpush2.msra.mxu0 0.0
        %466 = vmatprep.subr.mxu0 0.0
        %467 = vmatpush2.msra.mxu0 0.0
        %468 = vmatprep.subr.mxu0 0.0
        %469 = vmatpush2.msra.mxu0 0.0
        %470 = vmatprep.subr.mxu0 0.0
        %471 = vmatpush2.msra.mxu0 0.0
        %472 = vmatprep.subr.mxu0 0.0
        %473 = vmatpush2.msra.mxu0 0.0
        %474 = vmatprep.subr.mxu0 0.0
        %475 = vmatpush2.msra.mxu0 0.0
        %476 = vmatprep.subr.mxu0 0.0
        %477 = vmatpush2.msra.mxu0 0.0
        %478 = vmatprep.subr.mxu0 0.0
        %479 = vmatpush2.msra.mxu0 0.0
        %480 = vmatprep.subr.mxu0 0.0
        %481 = vmatpush2.msra.mxu0 0.0
        %482 = vmatprep.subr.mxu0 0.0
        %483 = vmatpush2.msra.mxu0 0.0
        %484 = vmatprep.subr.mxu0 0.0
        %485 = vmatpush2.msra.mxu0 0.0
        %486 = vmatprep.subr.mxu0 0.0
        %487 = vmatpush2.msra.mxu0 0.0
        %488 = vmatprep.subr.mxu0 0.0
        %489 = vmatpush2.msra.mxu0 0.0
        %490 = vmatprep.mubr.f32.mxu0 0.0
        %491 = vmatmul.mubr.f32.gmra.mxu0 %v424
        %v492 = vpop.f32.mrf.mxu0
        %v493 = vadd.f32 0.0, %v492
        %v494 = vpop.f32.mrf.mxu0
        %495 = vdwg.mxu0
        %s496 = scalar_lea.vmem %s1, 64
        %v497 = vld [vmem:[%s496] sm:$0xff]
        %v498 = vld [vmem:[%s496 + $0x8] sm:$0xff]
        %v499 = vld [vmem:[%s496 + $0x10] sm:$0xff]
        %v500 = vld [vmem:[%s496 + $0x18] sm:$0xff]
        %v501 = vld [vmem:[%s496 + $0x20] sm:$0xff]
        %v502 = vld [vmem:[%s496 + $0x28] sm:$0xff]
        %v503 = vld [vmem:[%s496 + $0x30] sm:$0xff]
        %v504 = vld [vmem:[%s496 + $0x38] sm:$0xff]
        %505 = vmatprep.subr.mxu0 0.0
        %506 = vmatpush1.msra.mxu0 0.0
        %507 = vmatprep.subr.mxu0 0.0
        %508 = vmatpush1.msra.mxu0 0.0
        %509 = vmatprep.subr.mxu0 0.0
        %510 = vmatpush1.msra.mxu0 0.0
        %511 = vmatprep.subr.mxu0 0.0
        %512 = vmatpush1.msra.mxu0 0.0
        %513 = vmatprep.subr.mxu0 0.0
        %514 = vmatpush1.msra.mxu0 0.0
        %515 = vmatprep.subr.mxu0 0.0
        %516 = vmatpush1.msra.mxu0 0.0
        %517 = vmatprep.subr.mxu0 0.0
        %518 = vmatpush1.msra.mxu0 0.0
        %519 = vmatprep.subr.mxu0 0.0
        %520 = vmatpush1.msra.mxu0 0.0
        %521 = vmatprep.subr.mxu0 0.0
        %522 = vmatpush1.msra.mxu0 %v504
        %523 = vmatprep.subr.mxu0 0.0
        %524 = vmatpush1.msra.mxu0 %v503
        %525 = vmatprep.subr.mxu0 0.0
        %526 = vmatpush1.msra.mxu0 %v502
        %527 = vmatprep.subr.mxu0 0.0
        %528 = vmatpush1.msra.mxu0 %v501
        %529 = vmatprep.subr.mxu0 0.0
        %530 = vmatpush1.msra.mxu0 %v500
        %531 = vmatprep.subr.mxu0 0.0
        %532 = vmatpush1.msra.mxu0 %v499
        %533 = vmatprep.subr.mxu0 0.0
        %534 = vmatpush1.msra.mxu0 %v498
        %535 = vmatprep.subr.mxu0 0.0
        %536 = vmatpush1.msra.mxu0 %v497
        %537 = vmatprep.subr.mxu0 0.0
        %538 = vmatpush2.msra.mxu0 0.0
        %539 = vmatprep.subr.mxu0 0.0
        %540 = vmatpush2.msra.mxu0 0.0
        %541 = vmatprep.subr.mxu0 0.0
        %542 = vmatpush2.msra.mxu0 0.0
        %543 = vmatprep.subr.mxu0 0.0
        %544 = vmatpush2.msra.mxu0 0.0
        %545 = vmatprep.subr.mxu0 0.0
        %546 = vmatpush2.msra.mxu0 0.0
        %547 = vmatprep.subr.mxu0 0.0
        %548 = vmatpush2.msra.mxu0 0.0
        %549 = vmatprep.subr.mxu0 0.0
        %550 = vmatpush2.msra.mxu0 0.0
        %551 = vmatprep.subr.mxu0 0.0
        %552 = vmatpush2.msra.mxu0 0.0
        %553 = vmatprep.subr.mxu0 0.0
        %554 = vmatpush2.msra.mxu0 0.0
        %555 = vmatprep.subr.mxu0 0.0
        %556 = vmatpush2.msra.mxu0 0.0
        %557 = vmatprep.subr.mxu0 0.0
        %558 = vmatpush2.msra.mxu0 0.0
        %559 = vmatprep.subr.mxu0 0.0
        %560 = vmatpush2.msra.mxu0 0.0
        %561 = vmatprep.subr.mxu0 0.0
        %562 = vmatpush2.msra.mxu0 0.0
        %563 = vmatprep.subr.mxu0 0.0
        %564 = vmatpush2.msra.mxu0 0.0
        %565 = vmatprep.subr.mxu0 0.0
        %566 = vmatpush2.msra.mxu0 0.0
        %567 = vmatprep.subr.mxu0 0.0
        %568 = vmatpush2.msra.mxu0 0.0
        %569 = vmatprep.mubr.f32.mxu0 0.0
        %570 = vmatmul.mubr.f32.gmra.mxu0 %v424
        %v571 = vpop.f32.mrf.mxu0
        %v572 = vadd.f32 0.0, %v571
        %v573 = vpop.f32.mrf.mxu0
        %574 = vdwg.mxu0
        %v575 = vmax.f32 %v493, %v572
        %v576 = vld [vmem:[%s2] sm:$0xff]
        %v577 = vld [vmem:[%s2 + $0x8] sm:$0xff]
        %v578 = vld [vmem:[%s2 + $0x10] sm:$0xff]
        %v579 = vld [vmem:[%s2 + $0x18] sm:$0xff]
        %s580 = scalar_lea.vmem %s2, 32
        %v581 = vld [vmem:[%s580] sm:$0xff]
        %v582 = vld [vmem:[%s580 + $0x8] sm:$0xff]
        %v583 = vld [vmem:[%s580 + $0x10] sm:$0xff]
        %v584 = vld [vmem:[%s580 + $0x18] sm:$0xff]
        %v586 = vrot.slane %v575, 1
        %vm587 = vcmask 261120
        %v588 = vsel %vm587, %v586, 0
        %590 = vmatprep.subr.mxu0 0.0
        %591 = vmatpush1.msra.mxu0 0.0
        %592 = vmatprep.subr.mxu0 0.0
        %593 = vmatpush1.msra.mxu0 0.0
        %594 = vmatprep.subr.mxu0 0.0
        %595 = vmatpush1.msra.mxu0 0.0
        %596 = vmatprep.subr.mxu0 0.0
        %597 = vmatpush1.msra.mxu0 0.0
        %598 = vmatprep.subr.mxu0 0.0
        %599 = vmatpush1.msra.mxu0 0.0
        %600 = vmatprep.subr.mxu0 0.0
        %601 = vmatpush1.msra.mxu0 0.0
        %602 = vmatprep.subr.mxu0 0.0
        %603 = vmatpush1.msra.mxu0 0.0
        %604 = vmatprep.subr.mxu0 0.0
        %605 = vmatpush1.msra.mxu0 0.0
        %606 = vmatprep.subr.mxu0 0.0
        %607 = vmatpush1.msra.mxu0 0.0
        %608 = vmatprep.subr.mxu0 0.0
        %609 = vmatpush1.msra.mxu0 0.0
        %610 = vmatprep.subr.mxu0 0.0
        %611 = vmatpush1.msra.mxu0 0.0
        %612 = vmatprep.subr.mxu0 0.0
        %613 = vmatpush1.msra.mxu0 0.0
        %614 = vmatprep.subr.mxu0 0.0
        %615 = vmatpush1.msra.mxu0 %v584
        %616 = vmatprep.subr.mxu0 0.0
        %617 = vmatpush1.msra.mxu0 %v583
        %618 = vmatprep.subr.mxu0 0.0
        %619 = vmatpush1.msra.mxu0 %v582
        %620 = vmatprep.subr.mxu0 0.0
        %621 = vmatpush1.msra.mxu0 %v581
        %622 = vmatprep.subr.mxu0 0.0
        %623 = vmatpush2.msra.mxu0 0.0
        %624 = vmatprep.subr.mxu0 0.0
        %625 = vmatpush2.msra.mxu0 0.0
        %626 = vmatprep.subr.mxu0 0.0
        %627 = vmatpush2.msra.mxu0 0.0
        %628 = vmatprep.subr.mxu0 0.0
        %629 = vmatpush2.msra.mxu0 0.0
        %630 = vmatprep.subr.mxu0 0.0
        %631 = vmatpush2.msra.mxu0 0.0
        %632 = vmatprep.subr.mxu0 0.0
        %633 = vmatpush2.msra.mxu0 0.0
        %634 = vmatprep.subr.mxu0 0.0
        %635 = vmatpush2.msra.mxu0 0.0
        %636 = vmatprep.subr.mxu0 0.0
        %637 = vmatpush2.msra.mxu0 0.0
        %638 = vmatprep.subr.mxu0 0.0
        %639 = vmatpush2.msra.mxu0 0.0
        %640 = vmatprep.subr.mxu0 0.0
        %641 = vmatpush2.msra.mxu0 0.0
        %642 = vmatprep.subr.mxu0 0.0
        %643 = vmatpush2.msra.mxu0 0.0
        %644 = vmatprep.subr.mxu0 0.0
        %645 = vmatpush2.msra.mxu0 0.0
        %646 = vmatprep.subr.mxu0 0.0
        %647 = vmatpush2.msra.mxu0 0.0
        %648 = vmatprep.subr.mxu0 0.0
        %649 = vmatpush2.msra.mxu0 0.0
        %650 = vmatprep.subr.mxu0 0.0
        %651 = vmatpush2.msra.mxu0 0.0
        %652 = vmatprep.subr.mxu0 0.0
        %653 = vmatpush2.msra.mxu0 0.0
        %654 = vmatprep.mubr.f32.mxu0 0.0
        %655 = vmatmul.mubr.f32.gmra.mxu0 %v588
        %v656 = vpop.f32.mrf.mxu0
        %v657 = vadd.f32 0.0, %v656
        %v658 = vpop.f32.mrf.mxu0
        %659 = vdwg.mxu0
        %v660 = vsel %vm587, %v575, 0
        %662 = vmatprep.subr.mxu0 0.0
        %663 = vmatpush1.msra.mxu0 0.0
        %664 = vmatprep.subr.mxu0 0.0
        %665 = vmatpush1.msra.mxu0 0.0
        %666 = vmatprep.subr.mxu0 0.0
        %667 = vmatpush1.msra.mxu0 0.0
        %668 = vmatprep.subr.mxu0 0.0
        %669 = vmatpush1.msra.mxu0 0.0
        %670 = vmatprep.subr.mxu0 0.0
        %671 = vmatpush1.msra.mxu0 0.0
        %672 = vmatprep.subr.mxu0 0.0
        %673 = vmatpush1.msra.mxu0 0.0
        %674 = vmatprep.subr.mxu0 0.0
        %675 = vmatpush1.msra.mxu0 0.0
        %676 = vmatprep.subr.mxu0 0.0
        %677 = vmatpush1.msra.mxu0 0.0
        %678 = vmatprep.subr.mxu0 0.0
        %679 = vmatpush1.msra.mxu0 0.0
        %680 = vmatprep.subr.mxu0 0.0
        %681 = vmatpush1.msra.mxu0 0.0
        %682 = vmatprep.subr.mxu0 0.0
        %683 = vmatpush1.msra.mxu0 0.0
        %684 = vmatprep.subr.mxu0 0.0
        %685 = vmatpush1.msra.mxu0 0.0
        %686 = vmatprep.subr.mxu0 0.0
        %687 = vmatpush1.msra.mxu0 %v579
        %688 = vmatprep.subr.mxu0 0.0
        %689 = vmatpush1.msra.mxu0 %v578
        %690 = vmatprep.subr.mxu0 0.0
        %691 = vmatpush1.msra.mxu0 %v577
        %692 = vmatprep.subr.mxu0 0.0
        %693 = vmatpush1.msra.mxu0 %v576
        %694 = vmatprep.subr.mxu0 0.0
        %695 = vmatpush2.msra.mxu0 0.0
        %696 = vmatprep.subr.mxu0 0.0
        %697 = vmatpush2.msra.mxu0 0.0
        %698 = vmatprep.subr.mxu0 0.0
        %699 = vmatpush2.msra.mxu0 0.0
        %700 = vmatprep.subr.mxu0 0.0
        %701 = vmatpush2.msra.mxu0 0.0
        %702 = vmatprep.subr.mxu0 0.0
        %703 = vmatpush2.msra.mxu0 0.0
        %704 = vmatprep.subr.mxu0 0.0
        %705 = vmatpush2.msra.mxu0 0.0
        %706 = vmatprep.subr.mxu0 0.0
        %707 = vmatpush2.msra.mxu0 0.0
        %708 = vmatprep.subr.mxu0 0.0
        %709 = vmatpush2.msra.mxu0 0.0
        %710 = vmatprep.subr.mxu0 0.0
        %711 = vmatpush2.msra.mxu0 0.0
        %712 = vmatprep.subr.mxu0 0.0
        %713 = vmatpush2.msra.mxu0 0.0
        %714 = vmatprep.subr.mxu0 0.0
        %715 = vmatpush2.msra.mxu0 0.0
        %716 = vmatprep.subr.mxu0 0.0
        %717 = vmatpush2.msra.mxu0 0.0
        %718 = vmatprep.subr.mxu0 0.0
        %719 = vmatpush2.msra.mxu0 0.0
        %720 = vmatprep.subr.mxu0 0.0
        %721 = vmatpush2.msra.mxu0 0.0
        %722 = vmatprep.subr.mxu0 0.0
        %723 = vmatpush2.msra.mxu0 0.0
        %724 = vmatprep.subr.mxu0 0.0
        %725 = vmatpush2.msra.mxu0 0.0
        %726 = vmatprep.mubr.f32.mxu0 0.0
        %727 = vmatmul.mubr.f32.gmra.mxu0 %v660
        %v728 = vpop.f32.mrf.mxu0
        %v729 = vadd.f32 %v657, %v728
        %v730 = vpop.f32.mrf.mxu0
        %731 = vdwg.mxu0
        %s732 = scalar_lea.vmem %s2, 64
        %v733 = vld [vmem:[%s732] sm:$0xff]
        %v734 = vld [vmem:[%s732 + $0x8] sm:$0xff]
        %v735 = vld [vmem:[%s732 + $0x10] sm:$0xff]
        %v736 = vld [vmem:[%s732 + $0x18] sm:$0xff]
        %v737 = vrot.slane %v575, 2
        %v738 = vsel %vm587, %v737, 0
        %740 = vmatprep.subr.mxu0 0.0
        %741 = vmatpush1.msra.mxu0 0.0
        %742 = vmatprep.subr.mxu0 0.0
        %743 = vmatpush1.msra.mxu0 0.0
        %744 = vmatprep.subr.mxu0 0.0
        %745 = vmatpush1.msra.mxu0 0.0
        %746 = vmatprep.subr.mxu0 0.0
        %747 = vmatpush1.msra.mxu0 0.0
        %748 = vmatprep.subr.mxu0 0.0
        %749 = vmatpush1.msra.mxu0 0.0
        %750 = vmatprep.subr.mxu0 0.0
        %751 = vmatpush1.msra.mxu0 0.0
        %752 = vmatprep.subr.mxu0 0.0
        %753 = vmatpush1.msra.mxu0 0.0
        %754 = vmatprep.subr.mxu0 0.0
        %755 = vmatpush1.msra.mxu0 0.0
        %756 = vmatprep.subr.mxu0 0.0
        %757 = vmatpush1.msra.mxu0 0.0
        %758 = vmatprep.subr.mxu0 0.0
        %759 = vmatpush1.msra.mxu0 0.0
        %760 = vmatprep.subr.mxu0 0.0
        %761 = vmatpush1.msra.mxu0 0.0
        %762 = vmatprep.subr.mxu0 0.0
        %763 = vmatpush1.msra.mxu0 0.0
        %764 = vmatprep.subr.mxu0 0.0
        %765 = vmatpush1.msra.mxu0 %v736
        %766 = vmatprep.subr.mxu0 0.0
        %767 = vmatpush1.msra.mxu0 %v735
        %768 = vmatprep.subr.mxu0 0.0
        %769 = vmatpush1.msra.mxu0 %v734
        %770 = vmatprep.subr.mxu0 0.0
        %771 = vmatpush1.msra.mxu0 %v733
        %772 = vmatprep.subr.mxu0 0.0
        %773 = vmatpush2.msra.mxu0 0.0
        %774 = vmatprep.subr.mxu0 0.0
        %775 = vmatpush2.msra.mxu0 0.0
        %776 = vmatprep.subr.mxu0 0.0
        %777 = vmatpush2.msra.mxu0 0.0
        %778 = vmatprep.subr.mxu0 0.0
        %779 = vmatpush2.msra.mxu0 0.0
        %780 = vmatprep.subr.mxu0 0.0
        %781 = vmatpush2.msra.mxu0 0.0
        %782 = vmatprep.subr.mxu0 0.0
        %783 = vmatpush2.msra.mxu0 0.0
        %784 = vmatprep.subr.mxu0 0.0
        %785 = vmatpush2.msra.mxu0 0.0
        %786 = vmatprep.subr.mxu0 0.0
        %787 = vmatpush2.msra.mxu0 0.0
        %788 = vmatprep.subr.mxu0 0.0
        %789 = vmatpush2.msra.mxu0 0.0
        %790 = vmatprep.subr.mxu0 0.0
        %791 = vmatpush2.msra.mxu0 0.0
        %792 = vmatprep.subr.mxu0 0.0
        %793 = vmatpush2.msra.mxu0 0.0
        %794 = vmatprep.subr.mxu0 0.0
        %795 = vmatpush2.msra.mxu0 0.0
        %796 = vmatprep.subr.mxu0 0.0
        %797 = vmatpush2.msra.mxu0 0.0
        %798 = vmatprep.subr.mxu0 0.0
        %799 = vmatpush2.msra.mxu0 0.0
        %800 = vmatprep.subr.mxu0 0.0
        %801 = vmatpush2.msra.mxu0 0.0
        %802 = vmatprep.subr.mxu0 0.0
        %803 = vmatpush2.msra.mxu0 0.0
        %804 = vmatprep.mubr.f32.mxu0 0.0
        %805 = vmatmul.mubr.f32.gmra.mxu0 %v738
        %v806 = vpop.f32.mrf.mxu0
        %v807 = vadd.f32 0.0, %v806
        %v808 = vpop.f32.mrf.mxu0
        %809 = vdwg.mxu0
        %v810 = vadd.f32 %v729, %v807
        %v811 = vld [vmem:[%s3] sm:$0x1]
        %v813 = vlaneseq
        %v814 = vshrl.u32 %v813, 7
        %v815 = vsub.s32 0, %v814
        %v816 = vrot.slane %v811, %v815
        %v818 = vadd.f32 %v810, %v816
        %v819 = vmax.f32 %v818, 0.0
        %v820 = vld [vmem:[%s4] sm:$0xff]
        %v821 = vld [vmem:[%s4 + $0x8] sm:$0xff]
        %v822 = vld [vmem:[%s4 + $0x10] sm:$0xff]
        %v823 = vld [vmem:[%s4 + $0x18] sm:$0xff]
        %v824 = vld [vmem:[%s4 + $0x20] sm:$0xff]
        %v825 = vld [vmem:[%s4 + $0x28] sm:$0xff]
        %s826 = scalar_lea.vmem %s4, 48
        %v827 = vld [vmem:[%s826] sm:$0xff]
        %v828 = vld [vmem:[%s826 + $0x8] sm:$0xff]
        %v829 = vld [vmem:[%s826 + $0x10] sm:$0xff]
        %v830 = vld [vmem:[%s826 + $0x18] sm:$0xff]
        %v831 = vld [vmem:[%s826 + $0x20] sm:$0xff]
        %v832 = vld [vmem:[%s826 + $0x28] sm:$0xff]
        %v834 = vrot.slane %v819, 1
        %vm835 = vcmask 392192
        %v836 = vsel %vm835, %v834, 0
        %838 = vmatprep.subr.mxu0 0.0
        %839 = vmatpush1.msra.mxu0 0.0
        %840 = vmatprep.subr.mxu0 0.0
        %841 = vmatpush1.msra.mxu0 0.0
        %842 = vmatprep.subr.mxu0 0.0
        %843 = vmatpush1.msra.mxu0 0.0
        %844 = vmatprep.subr.mxu0 0.0
        %845 = vmatpush1.msra.mxu0 0.0
        %846 = vmatprep.subr.mxu0 0.0
        %847 = vmatpush1.msra.mxu0 0.0
        %848 = vmatprep.subr.mxu0 0.0
        %849 = vmatpush1.msra.mxu0 0.0
        %850 = vmatprep.subr.mxu0 0.0
        %851 = vmatpush1.msra.mxu0 0.0
        %852 = vmatprep.subr.mxu0 0.0
        %853 = vmatpush1.msra.mxu0 0.0
        %854 = vmatprep.subr.mxu0 0.0
        %855 = vmatpush1.msra.mxu0 0.0
        %856 = vmatprep.subr.mxu0 0.0
        %857 = vmatpush1.msra.mxu0 0.0
        %858 = vmatprep.subr.mxu0 0.0
        %859 = vmatpush1.msra.mxu0 %v832
        %860 = vmatprep.subr.mxu0 0.0
        %861 = vmatpush1.msra.mxu0 %v831
        %862 = vmatprep.subr.mxu0 0.0
        %863 = vmatpush1.msra.mxu0 %v830
        %864 = vmatprep.subr.mxu0 0.0
        %865 = vmatpush1.msra.mxu0 %v829
        %866 = vmatprep.subr.mxu0 0.0
        %867 = vmatpush1.msra.mxu0 %v828
        %868 = vmatprep.subr.mxu0 0.0
        %869 = vmatpush1.msra.mxu0 %v827
        %870 = vmatprep.subr.mxu0 0.0
        %871 = vmatpush2.msra.mxu0 0.0
        %872 = vmatprep.subr.mxu0 0.0
        %873 = vmatpush2.msra.mxu0 0.0
        %874 = vmatprep.subr.mxu0 0.0
        %875 = vmatpush2.msra.mxu0 0.0
        %876 = vmatprep.subr.mxu0 0.0
        %877 = vmatpush2.msra.mxu0 0.0
        %878 = vmatprep.subr.mxu0 0.0
        %879 = vmatpush2.msra.mxu0 0.0
        %880 = vmatprep.subr.mxu0 0.0
        %881 = vmatpush2.msra.mxu0 0.0
        %882 = vmatprep.subr.mxu0 0.0
        %883 = vmatpush2.msra.mxu0 0.0
        %884 = vmatprep.subr.mxu0 0.0
        %885 = vmatpush2.msra.mxu0 0.0
        %886 = vmatprep.subr.mxu0 0.0
        %887 = vmatpush2.msra.mxu0 0.0
        %888 = vmatprep.subr.mxu0 0.0
        %889 = vmatpush2.msra.mxu0 0.0
        %890 = vmatprep.subr.mxu0 0.0
        %891 = vmatpush2.msra.mxu0 0.0
        %892 = vmatprep.subr.mxu0 0.0
        %893 = vmatpush2.msra.mxu0 0.0
        %894 = vmatprep.subr.mxu0 0.0
        %895 = vmatpush2.msra.mxu0 0.0
        %896 = vmatprep.subr.mxu0 0.0
        %897 = vmatpush2.msra.mxu0 0.0
        %898 = vmatprep.subr.mxu0 0.0
        %899 = vmatpush2.msra.mxu0 0.0
        %900 = vmatprep.subr.mxu0 0.0
        %901 = vmatpush2.msra.mxu0 0.0
        %902 = vmatprep.mubr.f32.mxu0 0.0
        %903 = vmatmul.mubr.f32.gmra.mxu0 %v836
        %v904 = vpop.f32.mrf.mxu0
        %v905 = vadd.f32 0.0, %v904
        %v906 = vpop.f32.mrf.mxu0
        %907 = vdwg.mxu0
        %v908 = vsel %vm835, %v819, 0
        %910 = vmatprep.subr.mxu0 0.0
        %911 = vmatpush1.msra.mxu0 0.0
        %912 = vmatprep.subr.mxu0 0.0
        %913 = vmatpush1.msra.mxu0 0.0
        %914 = vmatprep.subr.mxu0 0.0
        %915 = vmatpush1.msra.mxu0 0.0
        %916 = vmatprep.subr.mxu0 0.0
        %917 = vmatpush1.msra.mxu0 0.0
        %918 = vmatprep.subr.mxu0 0.0
        %919 = vmatpush1.msra.mxu0 0.0
        %920 = vmatprep.subr.mxu0 0.0
        %921 = vmatpush1.msra.mxu0 0.0
        %922 = vmatprep.subr.mxu0 0.0
        %923 = vmatpush1.msra.mxu0 0.0
        %924 = vmatprep.subr.mxu0 0.0
        %925 = vmatpush1.msra.mxu0 0.0
        %926 = vmatprep.subr.mxu0 0.0
        %927 = vmatpush1.msra.mxu0 0.0
        %928 = vmatprep.subr.mxu0 0.0
        %929 = vmatpush1.msra.mxu0 0.0
        %930 = vmatprep.subr.mxu0 0.0
        %931 = vmatpush1.msra.mxu0 %v825
        %932 = vmatprep.subr.mxu0 0.0
        %933 = vmatpush1.msra.mxu0 %v824
        %934 = vmatprep.subr.mxu0 0.0
        %935 = vmatpush1.msra.mxu0 %v823
        %936 = vmatprep.subr.mxu0 0.0
        %937 = vmatpush1.msra.mxu0 %v822
        %938 = vmatprep.subr.mxu0 0.0
        %939 = vmatpush1.msra.mxu0 %v821
        %940 = vmatprep.subr.mxu0 0.0
        %941 = vmatpush1.msra.mxu0 %v820
        %942 = vmatprep.subr.mxu0 0.0
        %943 = vmatpush2.msra.mxu0 0.0
        %944 = vmatprep.subr.mxu0 0.0
        %945 = vmatpush2.msra.mxu0 0.0
        %946 = vmatprep.subr.mxu0 0.0
        %947 = vmatpush2.msra.mxu0 0.0
        %948 = vmatprep.subr.mxu0 0.0
        %949 = vmatpush2.msra.mxu0 0.0
        %950 = vmatprep.subr.mxu0 0.0
        %951 = vmatpush2.msra.mxu0 0.0
        %952 = vmatprep.subr.mxu0 0.0
        %953 = vmatpush2.msra.mxu0 0.0
        %954 = vmatprep.subr.mxu0 0.0
        %955 = vmatpush2.msra.mxu0 0.0
        %956 = vmatprep.subr.mxu0 0.0
        %957 = vmatpush2.msra.mxu0 0.0
        %958 = vmatprep.subr.mxu0 0.0
        %959 = vmatpush2.msra.mxu0 0.0
        %960 = vmatprep.subr.mxu0 0.0
        %961 = vmatpush2.msra.mxu0 0.0
        %962 = vmatprep.subr.mxu0 0.0
        %963 = vmatpush2.msra.mxu0 0.0
        %964 = vmatprep.subr.mxu0 0.0
        %965 = vmatpush2.msra.mxu0 0.0
        %966 = vmatprep.subr.mxu0 0.0
        %967 = vmatpush2.msra.mxu0 0.0
        %968 = vmatprep.subr.mxu0 0.0
        %969 = vmatpush2.msra.mxu0 0.0
        %970 = vmatprep.subr.mxu0 0.0
        %971 = vmatpush2.msra.mxu0 0.0
        %972 = vmatprep.subr.mxu0 0.0
        %973 = vmatpush2.msra.mxu0 0.0
        %974 = vmatprep.mubr.f32.mxu0 0.0
        %975 = vmatmul.mubr.f32.gmra.mxu0 %v908
        %v976 = vpop.f32.mrf.mxu0
        %v977 = vadd.f32 %v905, %v976
        %v978 = vpop.f32.mrf.mxu0
        %979 = vdwg.mxu0
        %s980 = scalar_lea.vmem %s4, 96
        %v981 = vld [vmem:[%s980] sm:$0xff]
        %v982 = vld [vmem:[%s980 + $0x8] sm:$0xff]
        %v983 = vld [vmem:[%s980 + $0x10] sm:$0xff]
        %v984 = vld [vmem:[%s980 + $0x18] sm:$0xff]
        %v985 = vld [vmem:[%s980 + $0x20] sm:$0xff]
        %v986 = vld [vmem:[%s980 + $0x28] sm:$0xff]
        %v987 = vrot.slane %v819, 2
        %v988 = vsel %vm835, %v987, 0
        %990 = vmatprep.subr.mxu0 0.0
        %991 = vmatpush1.msra.mxu0 0.0
        %992 = vmatprep.subr.mxu0 0.0
        %993 = vmatpush1.msra.mxu0 0.0
        %994 = vmatprep.subr.mxu0 0.0
        %995 = vmatpush1.msra.mxu0 0.0
        %996 = vmatprep.subr.mxu0 0.0
        %997 = vmatpush1.msra.mxu0 0.0
        %998 = vmatprep.subr.mxu0 0.0
        %999 = vmatpush1.msra.mxu0 0.0
        %1000 = vmatprep.subr.mxu0 0.0
        %1001 = vmatpush1.msra.mxu0 0.0
        %1002 = vmatprep.subr.mxu0 0.0
        %1003 = vmatpush1.msra.mxu0 0.0
        %1004 = vmatprep.subr.mxu0 0.0
        %1005 = vmatpush1.msra.mxu0 0.0
        %1006 = vmatprep.subr.mxu0 0.0
        %1007 = vmatpush1.msra.mxu0 0.0
        %1008 = vmatprep.subr.mxu0 0.0
        %1009 = vmatpush1.msra.mxu0 0.0
        %1010 = vmatprep.subr.mxu0 0.0
        %1011 = vmatpush1.msra.mxu0 %v986
        %1012 = vmatprep.subr.mxu0 0.0
        %1013 = vmatpush1.msra.mxu0 %v985
        %1014 = vmatprep.subr.mxu0 0.0
        %1015 = vmatpush1.msra.mxu0 %v984
        %1016 = vmatprep.subr.mxu0 0.0
        %1017 = vmatpush1.msra.mxu0 %v983
        %1018 = vmatprep.subr.mxu0 0.0
        %1019 = vmatpush1.msra.mxu0 %v982
        %1020 = vmatprep.subr.mxu0 0.0
        %1021 = vmatpush1.msra.mxu0 %v981
        %1022 = vmatprep.subr.mxu0 0.0
        %1023 = vmatpush2.msra.mxu0 0.0
        %1024 = vmatprep.subr.mxu0 0.0
        %1025 = vmatpush2.msra.mxu0 0.0
        %1026 = vmatprep.subr.mxu0 0.0
        %1027 = vmatpush2.msra.mxu0 0.0
        %1028 = vmatprep.subr.mxu0 0.0
        %1029 = vmatpush2.msra.mxu0 0.0
        %1030 = vmatprep.subr.mxu0 0.0
        %1031 = vmatpush2.msra.mxu0 0.0
        %1032 = vmatprep.subr.mxu0 0.0
        %1033 = vmatpush2.msra.mxu0 0.0
        %1034 = vmatprep.subr.mxu0 0.0
        %1035 = vmatpush2.msra.mxu0 0.0
        %1036 = vmatprep.subr.mxu0 0.0
        %1037 = vmatpush2.msra.mxu0 0.0
        %1038 = vmatprep.subr.mxu0 0.0
        %1039 = vmatpush2.msra.mxu0 0.0
        %1040 = vmatprep.subr.mxu0 0.0
        %1041 = vmatpush2.msra.mxu0 0.0
        %1042 = vmatprep.subr.mxu0 0.0
        %1043 = vmatpush2.msra.mxu0 0.0
        %1044 = vmatprep.subr.mxu0 0.0
        %1045 = vmatpush2.msra.mxu0 0.0
        %1046 = vmatprep.subr.mxu0 0.0
        %1047 = vmatpush2.msra.mxu0 0.0
        %1048 = vmatprep.subr.mxu0 0.0
        %1049 = vmatpush2.msra.mxu0 0.0
        %1050 = vmatprep.subr.mxu0 0.0
        %1051 = vmatpush2.msra.mxu0 0.0
        %1052 = vmatprep.subr.mxu0 0.0
        %1053 = vmatpush2.msra.mxu0 0.0
        %1054 = vmatprep.mubr.f32.mxu0 0.0
        %1055 = vmatmul.mubr.f32.gmra.mxu0 %v988
        %v1056 = vpop.f32.mrf.mxu0
        %v1057 = vadd.f32 0.0, %v1056
        %v1058 = vpop.f32.mrf.mxu0
        %1059 = vdwg.mxu0
        %v1060 = vadd.f32 %v977, %v1057
        %v1061 = vld [vmem:[%s5] sm:$0x1]
        %v1063 = vlaneseq
        %v1064 = vshrl.u32 %v1063, 7
        %v1065 = vsub.s32 0, %v1064
        %v1066 = vrot.slane %v1061, %v1065
        %v1068 = vadd.f32 %v1060, %v1066
        %v1069 = vmax.f32 %v1068, 0.0
        %vm1070 = vcmask 257024
        %1071 = vst.msk [vmem:[%s245] sm:$0xf] %vm1070, %v1069
        %s1072 = sand.u32 %s159, 1
        %s1073 = scalar_lea.sflag [#allocation3], %s1072
        %s1074 = sand.u32 %s159, 1
        %s1075 = smul.addr %s1074, 4
        %s1076 = scalar_lea.vmem [#allocation2], %s1075
        // Predicated region
        $region45: #{tpu_custom_call.1} parent=43 // pred_check
          %p1077 = pneg %p169
        $region46: #{tpu_custom_call.1} parent=43 // pred_check_branch
          %1079 = sbr.rel (%p1077) target = $region48
        $region47: #{tpu_custom_call.1} parent=43 // pred_region
          %s1081 = ssub.s32 64, 64
          %1082 = vsyncadd %s1073, %s1081
          %s1083 = smul.addr %s20, 64
          %s1084 = scalar_lea.hbm %s6, %s1083
          %s1086 = sshll.u32 %s1076, 4
          %s1087 = int_to_ptr.vmem [resolvable:$true] %s1086
          %1089 = dma.vmem_to_hbm [thread:$0]  %s1087, 64, %s1084, %s1073
        $region48: #{tpu_custom_call.1} parent=43 // pred_fallthru
          _
      $region44: #{tpu_custom_call.1} parent=5 // pred_fallthru
        _
      %p1090 = scmp.le.s32.totalorder 2, %s15
      // Predicated region
      $region49: #{tpu_custom_call.1} parent=5 // pred_check
        %p1091 = pneg %p1090
      $region50: #{tpu_custom_call.1} parent=5 // pred_check_branch
        %1093 = sbr.rel (%p1091) target = $region52
      $region51: #{tpu_custom_call.1} parent=5 // pred_region
        %s1094 = ssub.s32 %s15, 2
        // Predicated region
        $region53: #{tpu_custom_call.1} parent=51 // pred_check
          %p1095 = pneg %p175
        $region54: #{tpu_custom_call.1} parent=51 // pred_check_branch
          %1097 = sbr.rel (%p1095) target = $region56
        $region55: #{tpu_custom_call.1} parent=51 // pred_region
          %s1098 = sand.u32 %s160, 1
          %s1099 = scalar_lea.sflag [#allocation3], %s1098
          %s1100 = sand.u32 %s160, 1
          %s1101 = smul.addr %s1100, 4
          %s1102 = scalar_lea.vmem [#allocation2], %s1101
          %1103 = dma.done %s1099, 64
        $region56: #{tpu_custom_call.1} parent=51 // pred_fallthru
          _
      $region52: #{tpu_custom_call.1} parent=5 // pred_fallthru
        _
    $region6: #{tpu_custom_call.1} parent=1 // loop_footer
      %s19 = sadd.s32 1, %s15
    $region7: #{tpu_custom_call.1} parent=1 // loop_footer_branch
      %14 = sbr.rel target = $region3
    $region8: #{tpu_custom_call.1} parent=1 // loop_exit
      _
    %1104 = vsyncpa [#allocation3], 1
    %s1105 = scalar_lea.sflag [#allocation3], 1
    %1106 = vsyncpa %s1105, 1

</llo_original>
